<compile_context>
chip_gen: v6e
topology: v6e:2x2x1
jax: 0.10.0
libtpu: 0.0.40
codegen_flags: <defaults>
</compile_context>

<pallas_src>
import numpy as np
import jax
import jax.numpy as jnp
from jax import lax
from jax.experimental import pallas as pl
from jax.experimental.pallas import tpu as pltpu


def _round_up(x, m):
    return (x + m - 1) // m * m


def cross_entropy_loss_forward(params, x, labels, documents, spans, loss_mult,
                               *, block_m=512):
    """BCE pair loss + loss_mult * criterion(softmax of per-class doc scores)."""
    batch, num_captions, d_in = x.shape
    assert num_captions >= 2, "classifier head needs captions 0 and 1"
    d_hid = params["w_enc"].shape[1]
    n_doc = documents.shape[0]
    n_cls = len(spans)

    b_pad = _round_up(batch, 8)                       # caption rows per slot
    td = min(block_m, _round_up(n_doc, 16))           # doc row tile (mult of 16)
    n_doc_pad = _round_up(n_doc, td)
    n_steps = n_doc_pad // td

    # ---- tiny wrapper-side prep (no big copies: docs keep f32, no K padding) ----
    # caption layout: row (c * b_pad + b) = x[b, c, :]; padded rows are zero.
    x_cap = jnp.zeros((num_captions, b_pad, d_in), jnp.float32)
    x_cap = x_cap.at[:, :batch, :].set(jnp.swapaxes(x, 0, 1).astype(jnp.float32))
    x_cap = x_cap.reshape(num_captions * b_pad, d_in)

    lab = jnp.zeros((b_pad, 1), jnp.float32)
    lab = lab.at[:batch, 0].set(labels.astype(jnp.float32))

    docs_p = documents.astype(jnp.float32)
    if n_doc_pad != n_doc:                            # pad tail rows only
        docs_p = jnp.concatenate(
            [docs_p, jnp.zeros((n_doc_pad - n_doc, d_in), jnp.float32)], axis=0)

    cid_np = np.full((1, n_doc_pad), -1, np.int32)    # -1 => padded / no class
    inv_np = np.zeros((n_cls, 1), np.float32)
    for k, (s, e) in enumerate(spans):
        cid_np[0, s:e] = k
        inv_np[k, 0] = 1.0 / float(e - s)
    cls_ids = jnp.asarray(cid_np)
    inv_cnt = jnp.asarray(inv_np)

    w_enc = params["w_enc"].astype(jnp.bfloat16)      # tiny weight, cast once
    b_enc = params["b_enc"].reshape(1, d_hid).astype(jnp.float32)
    w_cls = params["w_cls"].reshape(1, d_hid).astype(jnp.float32)
    scalars = jnp.stack([params["b_cls"].reshape(()).astype(jnp.float32),
                         jnp.asarray(loss_mult, jnp.float32)])

    def kernel(scal_ref, xcap_ref, lab_ref, doc_ref, cid_ref, w_ref, be_ref,
               wc_ref, invc_ref, o_ref, cls_sum, smean_s, bce_s):
        i = pl.program_id(0)
        b_cls = scal_ref[0]
        mult = scal_ref[1]
        w = w_ref[...]                                 # bf16 (d_in, d_hid)
        be = be_ref[...]                               # f32  (1, d_hid)
        wc = wc_ref[...]                               # f32  (1, d_hid)

        # --- step 0: init accumulator, encode captions, pair-logit BCE head ---
        @pl.when(i == 0)
        def _():
            cls_sum[...] = jnp.zeros_like(cls_sum)
            cap = jnp.tanh(
                jnp.dot(xcap_ref[...].astype(jnp.bfloat16), w,
                        preferred_element_type=jnp.float32) + be)   # (C*b_pad, d)
            s0 = cap[0:b_pad]
            s1 = cap[b_pad:2 * b_pad]
            z = jnp.sum(s0 * s1 * wc, axis=-1, keepdims=True) + b_cls   # (b_pad,1)
            y = lab_ref[...]
            rmask = (lax.broadcasted_iota(jnp.int32, (b_pad, 1), 0)
                     < batch).astype(jnp.float32)
            bce_t = (jnp.maximum(z, 0.0) - z * y
                     + jnp.log(1.0 + jnp.exp(-jnp.abs(z)))) * rmask  # stable BCE
            bce_s[...] = jnp.sum(bce_t, axis=0, keepdims=True) / float(batch)
            sm = cap[0:b_pad]
            for c in range(1, num_captions):
                sm = sm + cap[c * b_pad:(c + 1) * b_pad]
            smean_s[...] = sm * (1.0 / float(num_captions))          # caption mean

        # --- every step: encode doc tile, accumulate per-class embedding sums ---
        enc = jnp.tanh(
            jnp.dot(doc_ref[...].astype(jnp.bfloat16), w,
                    preferred_element_type=jnp.float32) + be)        # (td, d) f32
        onehot = (lax.broadcasted_iota(jnp.int32, (n_cls, td), 0)
                  == cid_ref[...]).astype(jnp.float32)               # (K, td)
        cls_sum[...] += jnp.dot(onehot, enc,
                                preferred_element_type=jnp.float32)  # (K, d)

        # --- last step: class means -> logits -> softmax -> criterion -> loss ---
        @pl.when(i == pl.num_programs(0) - 1)
        def _():
            dmean_w = cls_sum[...] * invc_ref[...] * wc              # (K, d)
            # one tiny (b_pad, d) x (K, d)^T matmul, executed once per forward
            logits = lax.dot_general(
                smean_s[...], dmean_w,
                dimension_numbers=(((1,), (1,)), ((), ())),
                preferred_element_type=jnp.float32) + b_cls          # (b_pad, K)
            mx = jnp.max(logits, axis=1, keepdims=True)
            e = jnp.exp(logits - mx)
            p = e * pl.reciprocal(jnp.sum(e, axis=1, keepdims=True), approx=True)
            rmask = (lax.broadcasted_iota(jnp.int32, (b_pad, 1), 0)
                     < batch).astype(jnp.float32)
            p = p * rmask                                            # drop pad rows
            col = jnp.sum(p, axis=0, keepdims=True)                  # (1, K)
            total = jnp.sum(col * col, axis=1, keepdims=True)        # (1, 1)
            diag = jnp.sum(jnp.sum(p * p, axis=1, keepdims=True),
                           axis=0, keepdims=True)                    # (1, 1)
            crit = (total - 2.0 * diag) * (1.0 / float(batch * batch))
            o_ref[...] = bce_s[...] + crit * mult

    out = pl.pallas_call(
        kernel,
        out_shape=jax.ShapeDtypeStruct((1, 1), jnp.float32),
        grid=(n_steps,),
        in_specs=[
            pl.BlockSpec(memory_space=pltpu.MemorySpace.SMEM),           # [b_cls, mult]
            pl.BlockSpec((num_captions * b_pad, d_in), lambda i: (0, 0)),  # captions
            pl.BlockSpec((b_pad, 1), lambda i: (0, 0)),                  # labels
            pl.BlockSpec((td, d_in), lambda i: (i, 0)),                  # doc tile
            pl.BlockSpec((1, td), lambda i: (0, i)),                     # class ids
            pl.BlockSpec((d_in, d_hid), lambda i: (0, 0)),               # w_enc (bf16)
            pl.BlockSpec((1, d_hid), lambda i: (0, 0)),                  # b_enc
            pl.BlockSpec((1, d_hid), lambda i: (0, 0)),                  # w_cls
            pl.BlockSpec((n_cls, 1), lambda i: (0, 0)),                  # 1/doc counts
        ],
        out_specs=pl.BlockSpec((1, 1), lambda i: (0, 0)),
        scratch_shapes=[
            pltpu.VMEM((n_cls, d_hid), jnp.float32),   # per-class doc embedding sums
            pltpu.VMEM((b_pad, d_hid), jnp.float32),   # caption-mean embeddings
            pltpu.VMEM((1, 1), jnp.float32),           # BCE partial
        ],
        # grid axis is the doc reduction -> arbitrary.
        # TODO(synk): on v7x (2 TCs) a leading core-parallel axis with per-core
        # partial class sums would recover megacore sharding of the doc encode.
        compiler_params=pltpu.CompilerParams(
            dimension_semantics=("arbitrary",)),
    )(scalars, x_cap, lab, docs_p, cls_ids, w_enc, b_enc, w_cls, inv_cnt)
    return out[0, 0]


# TODO(synk): only loss_type='normal', three=False, return_scores=False is
# implemented (max/doublesoftmax reductions and the 3-way softmax head need the
# full (B*C, N_doc) pairwise-score kernel); json/pickle corpus loading is
# replaced by synthetic documents.

if __name__ == "__main__":
    B, C, D_IN, D_HID = 2, 2, 32, 128
    docs_per_class = [3, 5, 4, 4]                    # ragged spans, like the corpus
    cum = [0]
    for n in docs_per_class:
        cum.append(cum[-1] + n)
    spans = [(cum[i], cum[i + 1]) for i in range(len(docs_per_class))]
    n_docs = cum[-1]

    key = jax.random.PRNGKey(0)
    k = jax.random.split(key, 7)
    params = {
        "w_enc": jax.random.normal(k[0], (D_IN, D_HID), jnp.float32) * 0.1,
        "b_enc": jax.random.normal(k[1], (1, D_HID), jnp.float32) * 0.01,
        "w_cls": jax.random.normal(k[2], (1, D_HID), jnp.float32) * 0.1,
        "b_cls": jax.random.normal(k[3], (1, 1), jnp.float32) * 0.01,
    }
    x = jax.random.normal(k[4], (B, C, D_IN), jnp.float32)
    documents = jax.random.normal(k[5], (n_docs, D_IN), jnp.float32)
    labels = jax.random.bernoulli(k[6], 0.5, (B,)).astype(jnp.float32)

    loss = cross_entropy_loss_forward(params, x, labels, documents, spans,
                                      loss_mult=0.5)
    loss = jax.block_until_ready(loss)
    assert loss.shape == () and bool(jnp.isfinite(loss))
    print("KERNEL_OK")
</pallas_src>

<mosaic_0001>
module attributes {stable_mosaic.version = 11 : i64} {
  func.func @kernel(%arg0: i32, %arg1: memref<2xf32, #tpu.memory_space<smem>>, %arg2: memref<16x32xf32, #tpu.memory_space<vmem>>, %arg3: memref<8x1xf32, #tpu.memory_space<vmem>>, %arg4: memref<16x32xf32, #tpu.memory_space<vmem>>, %arg5: memref<1x16xi32, #tpu.memory_space<vmem>>, %arg6: memref<32x128xbf16, #tpu.memory_space<vmem>>, %arg7: memref<1x128xf32, #tpu.memory_space<vmem>>, %arg8: memref<1x128xf32, #tpu.memory_space<vmem>>, %arg9: memref<4x1xf32, #tpu.memory_space<vmem>>, %arg10: memref<1x1xf32, #tpu.memory_space<vmem>>, %arg11: memref<4x128xf32, #tpu.memory_space<vmem>>, %arg12: memref<8x128xf32, #tpu.memory_space<vmem>>, %arg13: memref<1x1xf32, #tpu.memory_space<vmem>>) attributes {dimension_semantics = [#tpu.dimension_semantics<arbitrary>], iteration_bounds = array<i64: 1>, scalar_prefetch = 0 : i64, scratch_operands = 3 : i64, tpu.core_type = #tpu.core_type<tc>, window_params = [{transform_indices = @transform_0, window_bounds = array<i64: 2>}, {pipeline_mode = #tpu.pipeline_mode<synchronous>, transform_indices = @transform_1, window_bounds = array<i64: 16, 32>}, {pipeline_mode = #tpu.pipeline_mode<synchronous>, transform_indices = @transform_2, window_bounds = array<i64: 8, 1>}, {transform_indices = @transform_3, window_bounds = array<i64: 16, 32>}, {transform_indices = @transform_4, window_bounds = array<i64: 1, 16>}, {pipeline_mode = #tpu.pipeline_mode<synchronous>, transform_indices = @transform_5, window_bounds = array<i64: 32, 128>}, {pipeline_mode = #tpu.pipeline_mode<synchronous>, transform_indices = @transform_6, window_bounds = array<i64: 1, 128>}, {pipeline_mode = #tpu.pipeline_mode<synchronous>, transform_indices = @transform_7, window_bounds = array<i64: 1, 128>}, {pipeline_mode = #tpu.pipeline_mode<synchronous>, transform_indices = @transform_8, window_bounds = array<i64: 4, 1>}, {pipeline_mode = #tpu.pipeline_mode<synchronous>, transform_indices = @transform_9, window_bounds = array<i64: 1, 1>}]} {
    %c0 = arith.constant 0 : index
    %0 = memref.load %arg1[%c0] : memref<2xf32, #tpu.memory_space<smem>>
    %c1 = arith.constant 1 : index
    %1 = memref.load %arg1[%c1] : memref<2xf32, #tpu.memory_space<smem>>
    %c0_0 = arith.constant 0 : index
    %c0_1 = arith.constant 0 : index
    %2 = vector.load %arg6[%c0_0, %c0_1] : memref<32x128xbf16, #tpu.memory_space<vmem>>, vector<32x128xbf16>
    %c0_2 = arith.constant 0 : index
    %c0_3 = arith.constant 0 : index
    %3 = vector.load %arg7[%c0_2, %c0_3] : memref<1x128xf32, #tpu.memory_space<vmem>>, vector<1x128xf32>
    %c0_4 = arith.constant 0 : index
    %c0_5 = arith.constant 0 : index
    %4 = vector.load %arg8[%c0_4, %c0_5] : memref<1x128xf32, #tpu.memory_space<vmem>>, vector<1x128xf32>
    %c0_i32 = arith.constant 0 : i32
    %5 = arith.cmpi eq, %arg0, %c0_i32 : i32
    %6 = arith.extui %5 : i1 to i32
    %c0_i32_6 = arith.constant 0 : i32
    %7 = arith.cmpi ne, %6, %c0_i32_6 : i32
    scf.if %7 {
      %cst_18 = arith.constant 0.000000e+00 : f32
      %27 = vector.broadcast %cst_18 : f32 to vector<4x128xf32>
      %c0_19 = arith.constant 0 : index
      %c0_20 = arith.constant 0 : index
      %28 = vector.load %arg11[%c0_19, %c0_20] : memref<4x128xf32, #tpu.memory_space<vmem>>, vector<4x128xf32>
      tpu.vector_store %arg11[%c0_19, %c0_20], %27 {strides = array<i32>} : memref<4x128xf32, #tpu.memory_space<vmem>>, vector<4x128xf32>,
      %c0_21 = arith.constant 0 : index
      %c0_22 = arith.constant 0 : index
      %29 = vector.load %arg2[%c0_21, %c0_22] : memref<16x32xf32, #tpu.memory_space<vmem>>, vector<16x32xf32>
      %30 = arith.truncf %29 : vector<16x32xf32> to vector<16x32xbf16>
      %cst_23 = arith.constant dense<0.000000e+00> : vector<16x128xf32>
      %31 = tpu.matmul %30, %2, %cst_23 {dimension_numbers = #tpu.dot_dimension_numbers<[1], [0], [0], [1], [0, 0, 1, 1], [], []>} : vector<16x32xbf16>, vector<32x128xbf16>, vector<16x128xf32> -> vector<16x128xf32>
      %32 = vector.broadcast %3 : vector<1x128xf32> to vector<16x128xf32>
      %33 = arith.addf %31, %32 : vector<16x128xf32>
      %34 = math.tanh %33 : vector<16x128xf32>
      %35 = vector.extract_strided_slice %34 {offsets = [0, 0], sizes = [8, 128], strides = [1, 1]} : vector<16x128xf32> to vector<8x128xf32>
      %36 = vector.extract_strided_slice %34 {offsets = [8, 0], sizes = [8, 128], strides = [1, 1]} : vector<16x128xf32> to vector<8x128xf32>
      %37 = arith.mulf %35, %36 : vector<8x128xf32>
      %38 = vector.broadcast %4 : vector<1x128xf32> to vector<8x128xf32>
      %39 = arith.mulf %37, %38 : vector<8x128xf32>
      %cst_24 = arith.constant dense<0.000000e+00> : vector<8xf32>
      %40 = vector.multi_reduction <add>, %39, %cst_24 [1] : vector<8x128xf32> to vector<8xf32>
      %41 = vector.shape_cast %40 : vector<8xf32> to vector<8x1xf32>
      %42 = vector.broadcast %0 : f32 to vector<8x1xf32>
      %43 = arith.addf %41, %42 : vector<8x1xf32>
      %c0_25 = arith.constant 0 : index
      %c0_26 = arith.constant 0 : index
      %44 = vector.load %arg3[%c0_25, %c0_26] : memref<8x1xf32, #tpu.memory_space<vmem>>, vector<8x1xf32>
      %45 = tpu.iota {dimensions = array<i32: 0>} : vector<8x1xi32>
      %c2_i32 = arith.constant 2 : i32
      %46 = vector.broadcast %c2_i32 : i32 to vector<8x1xi32>
      %47 = arith.cmpi slt, %45, %46 : vector<8x1xi32>
      %48 = arith.extui %47 : vector<8x1xi1> to vector<8x1xi32>
      %49 = arith.sitofp %48 : vector<8x1xi32> to vector<8x1xf32>
      %cst_27 = arith.constant 0.000000e+00 : f32
      %50 = vector.broadcast %cst_27 : f32 to vector<8x1xf32>
      %51 = arith.maximumf %43, %50 : vector<8x1xf32>
      %52 = arith.mulf %43, %44 : vector<8x1xf32>
      %53 = arith.subf %51, %52 : vector<8x1xf32>
      %54 = math.absf %43 : vector<8x1xf32>
      %cst_28 = arith.constant 0.000000e+00 : f32
      %55 = vector.broadcast %cst_28 : f32 to vector<8x1xf32>
      %56 = arith.subf %55, %54 : vector<8x1xf32>
      %57 = math.exp %56 : vector<8x1xf32>
      %cst_29 = arith.constant 1.000000e+00 : f32
      %58 = vector.broadcast %cst_29 : f32 to vector<8x1xf32>
      %59 = arith.addf %58, %57 : vector<8x1xf32>
      %60 = math.log %59 : vector<8x1xf32>
      %61 = arith.addf %53, %60 : vector<8x1xf32>
      %62 = arith.mulf %61, %49 : vector<8x1xf32>
      %cst_30 = arith.constant dense<0.000000e+00> : vector<1xf32>
      %63 = vector.multi_reduction <add>, %62, %cst_30 [0] : vector<8x1xf32> to vector<1xf32>
      %64 = vector.shape_cast %63 : vector<1xf32> to vector<1x1xf32>
      %cst_31 = arith.constant 2.000000e+00 : f32
      %65 = vector.broadcast %cst_31 : f32 to vector<1x1xf32>
      %66 = arith.divf %64, %65 : vector<1x1xf32>
      %c0_32 = arith.constant 0 : index
      %c0_33 = arith.constant 0 : index
      %67 = vector.load %arg13[%c0_32, %c0_33] : memref<1x1xf32, #tpu.memory_space<vmem>>, vector<1x1xf32>
      tpu.vector_store %arg13[%c0_32, %c0_33], %66 {strides = array<i32>} : memref<1x1xf32, #tpu.memory_space<vmem>>, vector<1x1xf32>,
      %68 = vector.extract_strided_slice %34 {offsets = [0, 0], sizes = [8, 128], strides = [1, 1]} : vector<16x128xf32> to vector<8x128xf32>
      %69 = vector.extract_strided_slice %34 {offsets = [8, 0], sizes = [8, 128], strides = [1, 1]} : vector<16x128xf32> to vector<8x128xf32>
      %70 = arith.addf %68, %69 : vector<8x128xf32>
      %cst_34 = arith.constant 5.000000e-01 : f32
      %71 = vector.broadcast %cst_34 : f32 to vector<8x128xf32>
      %72 = arith.mulf %70, %71 : vector<8x128xf32>
      %c0_35 = arith.constant 0 : index
      %c0_36 = arith.constant 0 : index
      %73 = vector.load %arg12[%c0_35, %c0_36] : memref<8x128xf32, #tpu.memory_space<vmem>>, vector<8x128xf32>
      tpu.vector_store %arg12[%c0_35, %c0_36], %72 {strides = array<i32>} : memref<8x128xf32, #tpu.memory_space<vmem>>, vector<8x128xf32>,
    } else {
    }
    %c0_7 = arith.constant 0 : index
    %c0_8 = arith.constant 0 : index
    %8 = vector.load %arg4[%c0_7, %c0_8] : memref<16x32xf32, #tpu.memory_space<vmem>>, vector<16x32xf32>
    %9 = arith.truncf %8 : vector<16x32xf32> to vector<16x32xbf16>
    %cst = arith.constant dense<0.000000e+00> : vector<16x128xf32>
    %10 = tpu.matmul %9, %2, %cst {dimension_numbers = #tpu.dot_dimension_numbers<[1], [0], [0], [1], [0, 0, 1, 1], [], []>} : vector<16x32xbf16>, vector<32x128xbf16>, vector<16x128xf32> -> vector<16x128xf32>
    %11 = vector.broadcast %3 : vector<1x128xf32> to vector<16x128xf32>
    %12 = arith.addf %10, %11 : vector<16x128xf32>
    %13 = math.tanh %12 : vector<16x128xf32>
    %14 = tpu.iota {dimensions = array<i32: 0>} : vector<4x16xi32>
    %c0_9 = arith.constant 0 : index
    %c0_10 = arith.constant 0 : index
    %15 = vector.load %arg5[%c0_9, %c0_10] : memref<1x16xi32, #tpu.memory_space<vmem>>, vector<1x16xi32>
    %16 = vector.broadcast %15 : vector<1x16xi32> to vector<4x16xi32>
    %17 = arith.cmpi eq, %14, %16 : vector<4x16xi32>
    %18 = arith.extui %17 : vector<4x16xi1> to vector<4x16xi32>
    %19 = arith.sitofp %18 : vector<4x16xi32> to vector<4x16xf32>
    %c0_11 = arith.constant 0 : index
    %c0_12 = arith.constant 0 : index
    %20 = vector.load %arg11[%c0_11, %c0_12] : memref<4x128xf32, #tpu.memory_space<vmem>>, vector<4x128xf32>
    %cst_13 = arith.constant dense<0.000000e+00> : vector<4x128xf32>
    %21 = tpu.matmul %19, %13, %cst_13 {dimension_numbers = #tpu.dot_dimension_numbers<[1], [0], [0], [1], [0, 0, 1, 1], [], []>} : vector<4x16xf32>, vector<16x128xf32>, vector<4x128xf32> -> vector<4x128xf32>
    %22 = arith.addf %20, %21 : vector<4x128xf32>
    %c0_14 = arith.constant 0 : index
    %c0_15 = arith.constant 0 : index
    %23 = vector.load %arg11[%c0_14, %c0_15] : memref<4x128xf32, #tpu.memory_space<vmem>>, vector<4x128xf32>
    tpu.vector_store %arg11[%c0_14, %c0_15], %22 {strides = array<i32>} : memref<4x128xf32, #tpu.memory_space<vmem>>, vector<4x128xf32>,
    %c0_i32_16 = arith.constant 0 : i32
    %24 = arith.cmpi eq, %arg0, %c0_i32_16 : i32
    %25 = arith.extui %24 : i1 to i32
    %c0_i32_17 = arith.constant 0 : i32
    %26 = arith.cmpi ne, %25, %c0_i32_17 : i32
    scf.if %26 {
      %c0_18 = arith.constant 0 : index
      %c0_19 = arith.constant 0 : index
      %27 = vector.load %arg11[%c0_18, %c0_19] : memref<4x128xf32, #tpu.memory_space<vmem>>, vector<4x128xf32>
      %c0_20 = arith.constant 0 : index
      %c0_21 = arith.constant 0 : index
      %28 = vector.load %arg9[%c0_20, %c0_21] : memref<4x1xf32, #tpu.memory_space<vmem>>, vector<4x1xf32>
      %29 = vector.broadcast %28 : vector<4x1xf32> to vector<4x128xf32>
      %30 = arith.mulf %27, %29 : vector<4x128xf32>
      %31 = vector.broadcast %4 : vector<1x128xf32> to vector<4x128xf32>
      %32 = arith.mulf %30, %31 : vector<4x128xf32>
      %c0_22 = arith.constant 0 : index
      %c0_23 = arith.constant 0 : index
      %33 = vector.load %arg12[%c0_22, %c0_23] : memref<8x128xf32, #tpu.memory_space<vmem>>, vector<8x128xf32>
      %cst_24 = arith.constant dense<0.000000e+00> : vector<8x4xf32>
      %34 = tpu.matmul %33, %32, %cst_24 {dimension_numbers = #tpu.dot_dimension_numbers<[1], [1], [0], [0], [0, 0, 1, 0], [], []>} : vector<8x128xf32>, vector<4x128xf32>, vector<8x4xf32> -> vector<8x4xf32>
      %35 = vector.broadcast %0 : f32 to vector<8x4xf32>
      %36 = arith.addf %34, %35 : vector<8x4xf32>
      %cst_25 = arith.constant dense<0xFF800000> : vector<8xf32>
      %37 = vector.multi_reduction <maximumf>, %36, %cst_25 [1] : vector<8x4xf32> to vector<8xf32>
      %38 = vector.shape_cast %37 : vector<8xf32> to vector<8x1xf32>
      %39 = vector.broadcast %38 : vector<8x1xf32> to vector<8x4xf32>
      %40 = arith.subf %36, %39 : vector<8x4xf32>
      %41 = math.exp %40 : vector<8x4xf32>
      %cst_26 = arith.constant dense<0.000000e+00> : vector<8xf32>
      %42 = vector.multi_reduction <add>, %41, %cst_26 [1] : vector<8x4xf32> to vector<8xf32>
      %43 = vector.shape_cast %42 : vector<8xf32> to vector<8x1xf32>
      %44 = tpu.reciprocal %43 {approx = true} : vector<8x1xf32> -> vector<8x1xf32>
      %45 = vector.broadcast %44 : vector<8x1xf32> to vector<8x4xf32>
      %46 = arith.mulf %41, %45 : vector<8x4xf32>
      %47 = tpu.iota {dimensions = array<i32: 0>} : vector<8x1xi32>
      %c2_i32 = arith.constant 2 : i32
      %48 = vector.broadcast %c2_i32 : i32 to vector<8x1xi32>
      %49 = arith.cmpi slt, %47, %48 : vector<8x1xi32>
      %50 = arith.extui %49 : vector<8x1xi1> to vector<8x1xi32>
      %51 = arith.sitofp %50 : vector<8x1xi32> to vector<8x1xf32>
      %52 = vector.broadcast %51 : vector<8x1xf32> to vector<8x4xf32>
      %53 = arith.mulf %46, %52 : vector<8x4xf32>
      %cst_27 = arith.constant dense<0.000000e+00> : vector<4xf32>
      %54 = vector.multi_reduction <add>, %53, %cst_27 [0] : vector<8x4xf32> to vector<4xf32>
      %55 = vector.shape_cast %54 : vector<4xf32> to vector<1x4xf32>
      %56 = arith.mulf %55, %55 : vector<1x4xf32>
      %cst_28 = arith.constant dense<0.000000e+00> : vector<1xf32>
      %57 = vector.multi_reduction <add>, %56, %cst_28 [1] : vector<1x4xf32> to vector<1xf32>
      %58 = vector.shape_cast %57 : vector<1xf32> to vector<1x1xf32>
      %59 = arith.mulf %53, %53 : vector<8x4xf32>
      %cst_29 = arith.constant dense<0.000000e+00> : vector<8xf32>
      %60 = vector.multi_reduction <add>, %59, %cst_29 [1] : vector<8x4xf32> to vector<8xf32>
      %61 = vector.shape_cast %60 : vector<8xf32> to vector<8x1xf32>
      %cst_30 = arith.constant dense<0.000000e+00> : vector<1xf32>
      %62 = vector.multi_reduction <add>, %61, %cst_30 [0] : vector<8x1xf32> to vector<1xf32>
      %63 = vector.shape_cast %62 : vector<1xf32> to vector<1x1xf32>
      %cst_31 = arith.constant 2.000000e+00 : f32
      %64 = vector.broadcast %cst_31 : f32 to vector<1x1xf32>
      %65 = arith.mulf %64, %63 : vector<1x1xf32>
      %66 = arith.subf %58, %65 : vector<1x1xf32>
      %cst_32 = arith.constant 2.500000e-01 : f32
      %67 = vector.broadcast %cst_32 : f32 to vector<1x1xf32>
      %68 = arith.mulf %66, %67 : vector<1x1xf32>
      %c0_33 = arith.constant 0 : index
      %c0_34 = arith.constant 0 : index
      %69 = vector.load %arg13[%c0_33, %c0_34] : memref<1x1xf32, #tpu.memory_space<vmem>>, vector<1x1xf32>
      %70 = vector.broadcast %1 : f32 to vector<1x1xf32>
      %71 = arith.mulf %68, %70 : vector<1x1xf32>
      %72 = arith.addf %69, %71 : vector<1x1xf32>
      %c0_35 = arith.constant 0 : index
      %c0_36 = arith.constant 0 : index
      %73 = vector.load %arg10[%c0_35, %c0_36] : memref<1x1xf32, #tpu.memory_space<vmem>>, vector<1x1xf32>
      tpu.vector_store %arg10[%c0_35, %c0_36], %72 {strides = array<i32>} : memref<1x1xf32, #tpu.memory_space<vmem>>, vector<1x1xf32>,
    } else {
    }
    return
  }
  func.func @transform_0(%arg0: i32) -> i32 {
    %c0_i32 = arith.constant 0 : i32
    %c0_i32_0 = arith.constant 0 : i32
    return %c0_i32 : i32
  }
  func.func @transform_1(%arg0: i32) -> (i32, i32) {
    %c0_i32 = arith.constant 0 : i32
    %c0_i32_0 = arith.constant 0 : i32
    %c0_i32_1 = arith.constant 0 : i32
    return %c0_i32, %c0_i32_0 : i32, i32
  }
  func.func @transform_2(%arg0: i32) -> (i32, i32) {
    %c0_i32 = arith.constant 0 : i32
    %c0_i32_0 = arith.constant 0 : i32
    %c0_i32_1 = arith.constant 0 : i32
    return %c0_i32, %c0_i32_0 : i32, i32
  }
  func.func @transform_3(%arg0: i32) -> (i32, i32) {
    %c0_i32 = arith.constant 0 : i32
    %c0_i32_0 = arith.constant 0 : i32
    return %arg0, %c0_i32 : i32, i32
  }
  func.func @transform_4(%arg0: i32) -> (i32, i32) {
    %c0_i32 = arith.constant 0 : i32
    %c0_i32_0 = arith.constant 0 : i32
    return %c0_i32, %arg0 : i32, i32
  }
  func.func @transform_5(%arg0: i32) -> (i32, i32) {
    %c0_i32 = arith.constant 0 : i32
    %c0_i32_0 = arith.constant 0 : i32
    %c0_i32_1 = arith.constant 0 : i32
    return %c0_i32, %c0_i32_0 : i32, i32
  }
  func.func @transform_6(%arg0: i32) -> (i32, i32) {
    %c0_i32 = arith.constant 0 : i32
    %c0_i32_0 = arith.constant 0 : i32
    %c0_i32_1 = arith.constant 0 : i32
    return %c0_i32, %c0_i32_0 : i32, i32
  }
  func.func @transform_7(%arg0: i32) -> (i32, i32) {
    %c0_i32 = arith.constant 0 : i32
    %c0_i32_0 = arith.constant 0 : i32
    %c0_i32_1 = arith.constant 0 : i32
    return %c0_i32, %c0_i32_0 : i32, i32
  }
  func.func @transform_8(%arg0: i32) -> (i32, i32) {
    %c0_i32 = arith.constant 0 : i32
    %c0_i32_0 = arith.constant 0 : i32
    %c0_i32_1 = arith.constant 0 : i32
    return %c0_i32, %c0_i32_0 : i32, i32
  }
  func.func @transform_9(%arg0: i32) -> (i32, i32) {
    %c0_i32 = arith.constant 0 : i32
    %c0_i32_0 = arith.constant 0 : i32
    %c0_i32_1 = arith.constant 0 : i32
    return %c0_i32, %c0_i32_0 : i32, i32
  }
}

</mosaic_0001>

<llo_original>
// kernel: tpu_custom_call.1
$region0: #{tpu_custom_call.1}
  #allocation0 [shape = 'u32[]', space=smem, size = 0x4, offset = 0x4, fixed_abs, tag = 'smem constant byte address 0x4 - core index']
  #allocation1 [shape = 'u32[144,128]{1,0:T(1,128)}', space=vmem, size = 0x12000, scoped, tag = 'internal scratch']
  #allocation2 [shape = 'f32[4,128]{1,0:T(4,128)}', space=vmem, size = 0x800, scoped, tag = 'scratch operand']
  #allocation3 [shape = 'f32[8,128]{1,0:T(8,128)}', space=vmem, size = 0x1000, scoped, tag = 'scratch operand']
  #allocation4 [shape = 'f32[1,1]{1,0:T(1,128)}', space=vmem, size = 0x200, scoped, tag = 'scratch operand']
  %s0 = inlined_call_operand.vmem [shape: f32[2], index: 0, kind: input, shape index: {}]
  %s1 = inlined_call_operand.hbm [shape: f32[16,32], index: 1, kind: input, shape index: {}]
  %s2 = inlined_call_operand.vmem [shape: f32[8,1], index: 2, kind: input, shape index: {}]
  %s3 = inlined_call_operand.vmem [shape: f32[16,32], index: 3, kind: input, shape index: {}]
  %s4 = inlined_call_operand.vmem [shape: s32[1,16], index: 4, kind: input, shape index: {}]
  %s5 = inlined_call_operand.hbm [shape: bf16[32,128], index: 5, kind: input, shape index: {}]
  %s6 = inlined_call_operand.vmem [shape: f32[1,128], index: 6, kind: input, shape index: {}]
  %s7 = inlined_call_operand.vmem [shape: f32[1,128], index: 7, kind: input, shape index: {}]
  %s8 = inlined_call_operand.vmem [shape: f32[4,1], index: 8, kind: input, shape index: {}]
  %s9 = inlined_call_operand.hbm [shape: f32[1,1], index: 9, kind: output, shape index: {}]
  %s10 = sld [smem:[#allocation0]]
  $region66: #{tpu_custom_call.1} parent=0
    _
  %s12 = ssub.s32 1, %s10
  %s13 = scalar_select 0, %s12, %s10
  $region1: #{tpu_custom_call.1} parent=0
    #allocation5 [shape = 'u8[512]{0}', space=smem, size = 0x200, scoped, tag = 'input window, operand 0, single buffered']
    #allocation6 [shape = 's32[1]{0}', space=sflag, size = 0x4, scoped, tag = 'scoped memory for tpu_custom_call.1']
    #allocation7 [shape = 's32[1]{0}', space=sflag, size = 0x4, scoped, tag = 'scoped memory for tpu_custom_call.1']
    #allocation8 [shape = 's32[1]{0}', space=sflag, size = 0x4, scoped, tag = 'scoped memory for tpu_custom_call.1']
    #allocation9 [shape = 'u8[8192]{0}', space=vmem, size = 0x2000, scoped, tag = 'input window, operand 1, single buffered']
    #allocation10 [shape = 'u8[8192]{0}', space=vmem, size = 0x2000, scoped, tag = 'input window, operand 5, single buffered']
    #allocation11 [shape = 's32[1]{0}', space=sflag, size = 0x4, scoped, tag = 'scoped memory for tpu_custom_call.1']
    #allocation12 [shape = 'u8[512]{0}', space=vmem, size = 0x400, scoped, tag = 'output window, operand 0, single buffered']
    %14 = vsyncpa [#allocation8], 0
    %15 = vsyncpa [#allocation6], 0
    %16 = vsyncpa [#allocation11], 0
    %17 = vsyncpa [#allocation7], 0
    // Predicated region
    $region2: #{tpu_custom_call.1} parent=1 // pred_check
      _
    $region3: #{tpu_custom_call.1} parent=1 // pred_check_branch
      %19 = sbr.rel (0) target = $region5
    $region4: #{tpu_custom_call.1} parent=1 // pred_region
      %s21 = ssub.s32 16, 16
      %22 = vsyncadd [#allocation8], %s21
      %s24 = sshll.u32 %s0, 4
      %s25 = int_to_ptr.vmem [resolvable:$true] %s24
      %27 = dma.vmem_to_smem %s25, 16, [#allocation5], [#allocation8]
    $region5: #{tpu_custom_call.1} parent=1 // pred_fallthru
      _
    // Predicated region
    $region6: #{tpu_custom_call.1} parent=1 // pred_check
      _
    $region7: #{tpu_custom_call.1} parent=1 // pred_check_branch
      %29 = sbr.rel (0) target = $region9
    $region8: #{tpu_custom_call.1} parent=1 // pred_region
      %s31 = ssub.s32 256, 256
      %32 = vsyncadd [#allocation6], %s31
      %s33 = sshll.u32 [#allocation9], 4
      %s34 = int_to_ptr.vmem [resolvable:$true] %s33
      %39 = dma.hbm_to_vmem [thread:$0]  %s1, 256, %s34, [#allocation6], 128, 128, 8
    $region9: #{tpu_custom_call.1} parent=1 // pred_fallthru
      _
    // Predicated region
    $region10: #{tpu_custom_call.1} parent=1 // pred_check
      _
    $region11: #{tpu_custom_call.1} parent=1 // pred_check_branch
      %41 = sbr.rel (0) target = $region13
    $region12: #{tpu_custom_call.1} parent=1 // pred_region
      _
    $region13: #{tpu_custom_call.1} parent=1 // pred_fallthru
      _
    // Predicated region
    $region14: #{tpu_custom_call.1} parent=1 // pred_check
      _
    $region15: #{tpu_custom_call.1} parent=1 // pred_check_branch
      %43 = sbr.rel (0) target = $region17
    $region16: #{tpu_custom_call.1} parent=1 // pred_region
      _
    $region17: #{tpu_custom_call.1} parent=1 // pred_fallthru
      _
    // Predicated region
    $region18: #{tpu_custom_call.1} parent=1 // pred_check
      _
    $region19: #{tpu_custom_call.1} parent=1 // pred_check_branch
      %45 = sbr.rel (0) target = $region21
    $region20: #{tpu_custom_call.1} parent=1 // pred_region
      _
    $region21: #{tpu_custom_call.1} parent=1 // pred_fallthru
      _
    // Predicated region
    $region22: #{tpu_custom_call.1} parent=1 // pred_check
      _
    $region23: #{tpu_custom_call.1} parent=1 // pred_check_branch
      %47 = sbr.rel (0) target = $region25
    $region24: #{tpu_custom_call.1} parent=1 // pred_region
      %s49 = ssub.s32 256, 256
      %50 = vsyncadd [#allocation11], %s49
      %s51 = sshll.u32 [#allocation10], 4
      %s52 = int_to_ptr.vmem [resolvable:$true] %s51
      %57 = dma.hbm_to_vmem [thread:$0]  %s5, 256, %s52, [#allocation11], 64, 64, 4
    $region25: #{tpu_custom_call.1} parent=1 // pred_fallthru
      _
    // Predicated region
    $region26: #{tpu_custom_call.1} parent=1 // pred_check
      _
    $region27: #{tpu_custom_call.1} parent=1 // pred_check_branch
      %59 = sbr.rel (0) target = $region29
    $region28: #{tpu_custom_call.1} parent=1 // pred_region
      _
    $region29: #{tpu_custom_call.1} parent=1 // pred_fallthru
      _
    // Predicated region
    $region30: #{tpu_custom_call.1} parent=1 // pred_check
      _
    $region31: #{tpu_custom_call.1} parent=1 // pred_check_branch
      %61 = sbr.rel (0) target = $region33
    $region32: #{tpu_custom_call.1} parent=1 // pred_region
      _
    $region33: #{tpu_custom_call.1} parent=1 // pred_fallthru
      _
    // Predicated region
    $region34: #{tpu_custom_call.1} parent=1 // pred_check
      _
    $region35: #{tpu_custom_call.1} parent=1 // pred_check_branch
      %63 = sbr.rel (0) target = $region37
    $region36: #{tpu_custom_call.1} parent=1 // pred_region
      _
    $region37: #{tpu_custom_call.1} parent=1 // pred_fallthru
      _
    // Predicated region
    $region38: #{tpu_custom_call.1} parent=1 // pred_check
      _
    $region39: #{tpu_custom_call.1} parent=1 // pred_check_branch
      %65 = sbr.rel (0) target = $region41
    $region40: #{tpu_custom_call.1} parent=1 // pred_region
      %66 = dma.done [#allocation8], 16
    $region41: #{tpu_custom_call.1} parent=1 // pred_fallthru
      _
    // Predicated region
    $region42: #{tpu_custom_call.1} parent=1 // pred_check
      _
    $region43: #{tpu_custom_call.1} parent=1 // pred_check_branch
      %68 = sbr.rel (0) target = $region45
    $region44: #{tpu_custom_call.1} parent=1 // pred_region
      %69 = dma.done [#allocation6], 256
    $region45: #{tpu_custom_call.1} parent=1 // pred_fallthru
      _
    // Predicated region
    $region46: #{tpu_custom_call.1} parent=1 // pred_check
      _
    $region47: #{tpu_custom_call.1} parent=1 // pred_check_branch
      %71 = sbr.rel (0) target = $region49
    $region48: #{tpu_custom_call.1} parent=1 // pred_region
      %72 = dma.done [#allocation11], 256
    $region49: #{tpu_custom_call.1} parent=1 // pred_fallthru
      _
    %73 = sfence
    %s75 = sld [smem:[#allocation5]]
    %s76 = sld [smem:[#allocation5 + $0x1]]
    %v77 = vld [vmem:[#allocation10] sm:$0xf]
    %v78 = vld [vmem:[#allocation10 + $0x4] sm:$0xf]
    %v79 = vld [vmem:[#allocation10 + $0x8] sm:$0xf]
    %v80 = vld [vmem:[#allocation10 + $0xc] sm:$0xf]
    %v81 = vld [vmem:[%s6] sm:$0x1]
    %v82 = vld [vmem:[%s7] sm:$0x1]
    %p83 = scmp.eq.s32.totalorder 0, 0
    // Predicated region
    $region50: #{tpu_custom_call.1} parent=1 // pred_check
      %p84 = pneg %p83
    $region51: #{tpu_custom_call.1} parent=1 // pred_check_branch
      %86 = sbr.rel (%p84) target = $region53
    $region52: #{tpu_custom_call.1} parent=1 // pred_region
      %87 = vst [vmem:[#allocation2] sm:$0xf] 0.0
      %v88 = vld [vmem:[#allocation9] sm:$0xff]
      %v89 = vld [vmem:[#allocation9 + $0x8] sm:$0xff]
      %v90 = vpack.c.bf16 %v89, %v88
      %v92 = vlaneseq
      %v93 = vshrl.u32 %v92, 7
      %v94 = vsub.s32 0, %v93
      %v95 = vrot.slane %v81, %v94
      %v101 = vunpack.c.l.b16 %v77
      %v102 = vunpack.c.l.b16 %v78
      %v103 = vunpack.c.l.b16 %v79
      %v104 = vunpack.c.l.b16 %v80
      %v105 = vpack.c.b16 %v102, %v101
      %v106 = vpack.c.b16 %v104, %v103
      %vm109 = vcmask 261120
      %v111 = vsel %vm109, %v90, 0
      %113 = vmatprep.subr.bf16.mxu0 0
      %114 = vmatpush1.bf16.msra.mxu0 0
      %115 = vmatprep.subr.bf16.mxu0 0
      %116 = vmatpush1.bf16.msra.mxu0 0
      %117 = vmatprep.subr.bf16.mxu0 0
      %118 = vmatpush1.bf16.msra.mxu0 0
      %119 = vmatprep.subr.bf16.mxu0 0
      %120 = vmatpush1.bf16.msra.mxu0 0
      %121 = vmatprep.subr.bf16.mxu0 0
      %122 = vmatpush1.bf16.msra.mxu0 0
      %123 = vmatprep.subr.bf16.mxu0 0
      %124 = vmatpush1.bf16.msra.mxu0 0
      %125 = vmatprep.subr.bf16.mxu0 0
      %126 = vmatpush1.bf16.msra.mxu0 %v106
      %127 = vmatprep.subr.bf16.mxu0 0
      %128 = vmatpush1.bf16.msra.mxu0 %v105
      %129 = vmatprep.subr.bf16.mxu0 0
      %130 = vmatpush2.bf16.msra.mxu0 0
      %131 = vmatprep.subr.bf16.mxu0 0
      %132 = vmatpush2.bf16.msra.mxu0 0
      %133 = vmatprep.subr.bf16.mxu0 0
      %134 = vmatpush2.bf16.msra.mxu0 0
      %135 = vmatprep.subr.bf16.mxu0 0
      %136 = vmatpush2.bf16.msra.mxu0 0
      %137 = vmatprep.subr.bf16.mxu0 0
      %138 = vmatpush2.bf16.msra.mxu0 0
      %139 = vmatprep.subr.bf16.mxu0 0
      %140 = vmatpush2.bf16.msra.mxu0 0
      %141 = vmatprep.subr.bf16.mxu0 0
      %142 = vmatpush2.bf16.msra.mxu0 0
      %143 = vmatprep.subr.bf16.mxu0 0
      %144 = vmatpush2.bf16.msra.mxu0 0
      %145 = vmatprep.mubr.bf16.mxu0 0
      %146 = vmatmul.mubr.bf16.gmra.mxu0 %v111
      %v147 = vpop.f32.mrf.mxu0
      %v148 = vadd.f32 %v95, %v147
      %v149 = vpop.f32.mrf.mxu0
      %v150 = vpop.f32.mrf.mxu0
      %v151 = vadd.f32 %v95, %v150
      %v152 = vpop.f32.mrf.mxu0
      %153 = vdwg.mxu0
      %v154 = vtanh.pop %v148
      %v155 = vtanh.pop %v151
      %v156 = vmul.f32 %v154, %v155
      %v158 = vlaneseq
      %v159 = vshrl.u32 %v158, 7
      %v160 = vsub.s32 0, %v159
      %v161 = vrot.slane %v82, %v160
      %v163 = vmul.f32 %v156, %v161
      %164 = vadd.xlane.f32.xlu0 %v163
      %v165 = vpop.xlane.xlu0 %164
      %v166 = vstv %s75
      %v167 = vadd.f32 %v165, %v166
      %v168 = vld [vmem:[%s2] sm:$0xff]
      %v169 = vlaneseq
      %v170 = vshrl.u32 %v169, 7
      %vm171 = vcmp.lt.s32.totalorder %v170, 2
      %v172 = vsel %vm171, 1, 0
      %v173 = vcvt.s32.f32 %v172
      %v174 = vmax.f32 %v167, 0.0
      %v175 = vmul.f32 %v167, %v168
      %v176 = vsub.f32 %v174, %v175
      %v177 = vand.u32 2147483647, %v167
      %v178 = vsub.f32 0.0, %v177
      %v179 = vmul.f32 %v178, 1.442695
      %v180 = vpow.pop %v179
      %v181 = vadd.f32 %v180, 1.0
      %v182 = vlog2.pop %v181
      %v183 = vmul.f32 %v182, 0.6931472
      %v184 = vadd.f32 %v176, %v183
      %v185 = vmul.f32 %v184, %v173
      %vm186 = vcmask 7168
      %v187 = vsel %vm186, %v185, 0.0
      %v188 = vrot.slane %v187, 4
      %v189 = vadd.f32 %v187, %v188
      %v190 = vrot.slane %v189, 2
      %v191 = vadd.f32 %v189, %v190
      %v192 = vrot.slane %v191, 1
      %v193 = vadd.f32 %v191, %v192
      %v194 = vrcp.pop 2.0
      %v195 = vmul.f32 %v193, %v194
      %vm196 = vcmask 0
      %197 = vst.msk [vmem:[#allocation4] sm:$0x1] %vm196, %v195
      %v198 = vadd.f32 %v154, %v155
      %v199 = vmul.f32 %v198, 0.5
      %200 = vst [vmem:[#allocation3] sm:$0xff] %v199
    $region53: #{tpu_custom_call.1} parent=1 // pred_fallthru
      _
    %v201 = vld [vmem:[%s3] sm:$0xff]
    %v202 = vld [vmem:[%s3 + $0x8] sm:$0xff]
    %v203 = vpack.c.bf16 %v202, %v201
    %v205 = vlaneseq
    %v206 = vshrl.u32 %v205, 7
    %v207 = vsub.s32 0, %v206
    %v208 = vrot.slane %v81, %v207
    %v214 = vunpack.c.l.b16 %v77
    %v215 = vunpack.c.l.b16 %v78
    %v216 = vunpack.c.l.b16 %v79
    %v217 = vunpack.c.l.b16 %v80
    %v218 = vpack.c.b16 %v215, %v214
    %v219 = vpack.c.b16 %v217, %v216
    %vm222 = vcmask 261120
    %v224 = vsel %vm222, %v203, 0
    %226 = vmatprep.subr.bf16.mxu0 0
    %227 = vmatpush1.bf16.msra.mxu0 0
    %228 = vmatprep.subr.bf16.mxu0 0
    %229 = vmatpush1.bf16.msra.mxu0 0
    %230 = vmatprep.subr.bf16.mxu0 0
    %231 = vmatpush1.bf16.msra.mxu0 0
    %232 = vmatprep.subr.bf16.mxu0 0
    %233 = vmatpush1.bf16.msra.mxu0 0
    %234 = vmatprep.subr.bf16.mxu0 0
    %235 = vmatpush1.bf16.msra.mxu0 0
    %236 = vmatprep.subr.bf16.mxu0 0
    %237 = vmatpush1.bf16.msra.mxu0 0
    %238 = vmatprep.subr.bf16.mxu0 0
    %239 = vmatpush1.bf16.msra.mxu0 %v219
    %240 = vmatprep.subr.bf16.mxu0 0
    %241 = vmatpush1.bf16.msra.mxu0 %v218
    %242 = vmatprep.subr.bf16.mxu0 0
    %243 = vmatpush2.bf16.msra.mxu0 0
    %244 = vmatprep.subr.bf16.mxu0 0
    %245 = vmatpush2.bf16.msra.mxu0 0
    %246 = vmatprep.subr.bf16.mxu0 0
    %247 = vmatpush2.bf16.msra.mxu0 0
    %248 = vmatprep.subr.bf16.mxu0 0
    %249 = vmatpush2.bf16.msra.mxu0 0
    %250 = vmatprep.subr.bf16.mxu0 0
    %251 = vmatpush2.bf16.msra.mxu0 0
    %252 = vmatprep.subr.bf16.mxu0 0
    %253 = vmatpush2.bf16.msra.mxu0 0
    %254 = vmatprep.subr.bf16.mxu0 0
    %255 = vmatpush2.bf16.msra.mxu0 0
    %256 = vmatprep.subr.bf16.mxu0 0
    %257 = vmatpush2.bf16.msra.mxu0 0
    %258 = vmatprep.mubr.bf16.mxu0 0
    %259 = vmatmul.mubr.bf16.gmra.mxu0 %v224
    %v260 = vpop.f32.mrf.mxu0
    %v261 = vadd.f32 %v208, %v260
    %v262 = vpop.f32.mrf.mxu0
    %v263 = vpop.f32.mrf.mxu0
    %v264 = vadd.f32 %v208, %v263
    %v265 = vpop.f32.mrf.mxu0
    %266 = vdwg.mxu0
    %v267 = vtanh.pop %v261
    %v268 = vtanh.pop %v264
    %v269 = vlaneseq
    %v270 = vshrl.u32 %v269, 7
    %v271 = vld [vmem:[%s4] sm:$0x1]
    %v272 = vlaneseq
    %v273 = vshrl.u32 %v272, 7
    %v274 = vsub.s32 0, %v273
    %v275 = vrot.slane %v271, %v274
    %vm276 = vcmp.eq.s32.totalorder %v270, %v275
    %v277 = vsel %vm276, 1, 0
    %v278 = vcvt.s32.f32 %v277
    %v279 = vld [vmem:[#allocation2] sm:$0xf]
    %vm280 = vcmask 130048
    %v282 = vsel %vm280, %v278, 0
    %284 = vmatprep.subr.mxu0 0.0
    %285 = vmatpush1.msra.mxu0 0.0
    %286 = vmatprep.subr.mxu0 0.0
    %287 = vmatpush1.msra.mxu0 0.0
    %288 = vmatprep.subr.mxu0 0.0
    %289 = vmatpush1.msra.mxu0 0.0
    %290 = vmatprep.subr.mxu0 0.0
    %291 = vmatpush1.msra.mxu0 0.0
    %292 = vmatprep.subr.mxu0 0.0
    %293 = vmatpush1.msra.mxu0 0.0
    %294 = vmatprep.subr.mxu0 0.0
    %295 = vmatpush1.msra.mxu0 0.0
    %296 = vmatprep.subr.mxu0 0.0
    %297 = vmatpush1.msra.mxu0 0.0
    %298 = vmatprep.subr.mxu0 0.0
    %299 = vmatpush1.msra.mxu0 0.0
    %300 = vmatprep.subr.mxu0 0.0
    %301 = vmatpush1.msra.mxu0 0.0
    %302 = vmatprep.subr.mxu0 0.0
    %303 = vmatpush1.msra.mxu0 0.0
    %304 = vmatprep.subr.mxu0 0.0
    %305 = vmatpush1.msra.mxu0 0.0
    %306 = vmatprep.subr.mxu0 0.0
    %307 = vmatpush1.msra.mxu0 0.0
    %308 = vmatprep.subr.mxu0 0.0
    %309 = vmatpush1.msra.mxu0 0.0
    %310 = vmatprep.subr.mxu0 0.0
    %311 = vmatpush1.msra.mxu0 0.0
    %312 = vmatprep.subr.mxu0 0.0
    %313 = vmatpush1.msra.mxu0 %v268
    %314 = vmatprep.subr.mxu0 0.0
    %315 = vmatpush1.msra.mxu0 %v267
    %316 = vmatprep.subr.mxu0 0.0
    %317 = vmatpush2.msra.mxu0 0.0
    %318 = vmatprep.subr.mxu0 0.0
    %319 = vmatpush2.msra.mxu0 0.0
    %320 = vmatprep.subr.mxu0 0.0
    %321 = vmatpush2.msra.mxu0 0.0
    %322 = vmatprep.subr.mxu0 0.0
    %323 = vmatpush2.msra.mxu0 0.0
    %324 = vmatprep.subr.mxu0 0.0
    %325 = vmatpush2.msra.mxu0 0.0
    %326 = vmatprep.subr.mxu0 0.0
    %327 = vmatpush2.msra.mxu0 0.0
    %328 = vmatprep.subr.mxu0 0.0
    %329 = vmatpush2.msra.mxu0 0.0
    %330 = vmatprep.subr.mxu0 0.0
    %331 = vmatpush2.msra.mxu0 0.0
    %332 = vmatprep.subr.mxu0 0.0
    %333 = vmatpush2.msra.mxu0 0.0
    %334 = vmatprep.subr.mxu0 0.0
    %335 = vmatpush2.msra.mxu0 0.0
    %336 = vmatprep.subr.mxu0 0.0
    %337 = vmatpush2.msra.mxu0 0.0
    %338 = vmatprep.subr.mxu0 0.0
    %339 = vmatpush2.msra.mxu0 0.0
    %340 = vmatprep.subr.mxu0 0.0
    %341 = vmatpush2.msra.mxu0 0.0
    %342 = vmatprep.subr.mxu0 0.0
    %343 = vmatpush2.msra.mxu0 0.0
    %344 = vmatprep.subr.mxu0 0.0
    %345 = vmatpush2.msra.mxu0 0.0
    %346 = vmatprep.subr.mxu0 0.0
    %347 = vmatpush2.msra.mxu0 0.0
    %348 = vmatprep.mubr.f32.mxu0 0.0
    %349 = vmatmul.mubr.f32.gmra.mxu0 %v282
    %v350 = vpop.f32.mrf.mxu0
    %v351 = vadd.f32 0.0, %v350
    %v352 = vpop.f32.mrf.mxu0
    %353 = vdwg.mxu0
    %v354 = vadd.f32 %v279, %v351
    %355 = vst [vmem:[#allocation2] sm:$0xf] %v354
    // Predicated region
    $region54: #{tpu_custom_call.1} parent=1 // pred_check
      %p356 = pneg %p83
    $region55: #{tpu_custom_call.1} parent=1 // pred_check_branch
      %358 = sbr.rel (%p356) target = $region57
    $region56: #{tpu_custom_call.1} parent=1 // pred_region
      %v359 = vld [vmem:[#allocation2] sm:$0xf]
      %v360 = vld [vmem:[%s8] sm:$0xf]
      %362 = vset.pattern.permute.xlu0 0
      %363 = vperm.xlu0 %362, %v360
      %v364 = vpop.permute.xlu0 %363
      %v366 = vmul.f32 %v359, %v364
      %v368 = vlaneseq
      %v369 = vshrl.u32 %v368, 7
      %v370 = vsub.s32 0, %v369
      %v371 = vrot.slane %v82, %v370
      %v373 = vmul.f32 %v366, %v371
      %v374 = vld [vmem:[#allocation3] sm:$0xff]
      %v375 = vstv %s75
      %376 = vmatprep.subr.mxu0 0.0
      %377 = vmatpush1.xpose.msra.mxu0 0.0
      %378 = vmatprep.subr.mxu0 0.0
      %379 = vmatpush1.xpose.msra.mxu0 0.0
      %380 = vmatprep.subr.mxu0 0.0
      %381 = vmatpush1.xpose.msra.mxu0 0.0
      %382 = vmatprep.subr.mxu0 0.0
      %383 = vmatpush1.xpose.msra.mxu0 0.0
      %384 = vmatprep.subr.mxu0 0.0
      %385 = vmatpush1.xpose.msra.mxu0 0.0
      %386 = vmatprep.subr.mxu0 0.0
      %387 = vmatpush1.xpose.msra.mxu0 0.0
      %388 = vmatprep.subr.mxu0 0.0
      %389 = vmatpush1.xpose.msra.mxu0 0.0
      %390 = vmatprep.subr.mxu0 0.0
      %391 = vmatpush1.xpose.msra.mxu0 0.0
      %392 = vmatprep.subr.mxu0 0.0
      %393 = vmatpush1.xpose.msra.mxu0 0.0
      %394 = vmatprep.subr.mxu0 0.0
      %395 = vmatpush1.xpose.msra.mxu0 0.0
      %396 = vmatprep.subr.mxu0 0.0
      %397 = vmatpush1.xpose.msra.mxu0 0.0
      %398 = vmatprep.subr.mxu0 0.0
      %399 = vmatpush1.xpose.msra.mxu0 0.0
      %400 = vmatprep.subr.mxu0 0.0
      %401 = vmatpush1.xpose.msra.mxu0 0.0
      %402 = vmatprep.subr.mxu0 0.0
      %403 = vmatpush1.xpose.msra.mxu0 0.0
      %404 = vmatprep.subr.mxu0 0.0
      %405 = vmatpush1.xpose.msra.mxu0 0.0
      %406 = vmatprep.subr.mxu0 0.0
      %407 = vmatpush1.xpose.msra.mxu0 %v373
      %408 = vmatprep.subr.mxu0 0.0
      %409 = vmatpush2.xpose.msra.mxu0 0.0
      %410 = vmatprep.subr.mxu0 0.0
      %411 = vmatpush2.xpose.msra.mxu0 0.0
      %412 = vmatprep.subr.mxu0 0.0
      %413 = vmatpush2.xpose.msra.mxu0 0.0
      %414 = vmatprep.subr.mxu0 0.0
      %415 = vmatpush2.xpose.msra.mxu0 0.0
      %416 = vmatprep.subr.mxu0 0.0
      %417 = vmatpush2.xpose.msra.mxu0 0.0
      %418 = vmatprep.subr.mxu0 0.0
      %419 = vmatpush2.xpose.msra.mxu0 0.0
      %420 = vmatprep.subr.mxu0 0.0
      %421 = vmatpush2.xpose.msra.mxu0 0.0
      %422 = vmatprep.subr.mxu0 0.0
      %423 = vmatpush2.xpose.msra.mxu0 0.0
      %424 = vmatprep.subr.mxu0 0.0
      %425 = vmatpush2.xpose.msra.mxu0 0.0
      %426 = vmatprep.subr.mxu0 0.0
      %427 = vmatpush2.xpose.msra.mxu0 0.0
      %428 = vmatprep.subr.mxu0 0.0
      %429 = vmatpush2.xpose.msra.mxu0 0.0
      %430 = vmatprep.subr.mxu0 0.0
      %431 = vmatpush2.xpose.msra.mxu0 0.0
      %432 = vmatprep.subr.mxu0 0.0
      %433 = vmatpush2.xpose.msra.mxu0 0.0
      %434 = vmatprep.subr.mxu0 0.0
      %435 = vmatpush2.xpose.msra.mxu0 0.0
      %436 = vmatprep.subr.mxu0 0.0
      %437 = vmatpush2.xpose.msra.mxu0 0.0
      %438 = vmatprep.subr.mxu0 0.0
      %439 = vmatpush2.xpose.msra.mxu0 0.0
      %440 = vmatprep.mubr.f32.mxu0 0.0
      %441 = vmatmul.mubr.f32.gmra.mxu0 %v374
      %v442 = vpop.f32.mrf.mxu0
      %v443 = vadd.f32 %v375, %v442
      %v444 = vpop.f32.mrf.mxu0
      %445 = vdwg.mxu0
      %vm446 = vcmask 31744
      %v447 = vsel %vm446, %v443, -inf
      %448 = vmax.xlane.f32.xlu0 %v447
      %v449 = vpop.xlane.xlu0 %448
      %v450 = vsub.f32 %v443, %v449
      %v451 = vmul.f32 %v450, 1.442695
      %v452 = vpow.pop %v451
      %v453 = vsel %vm446, %v452, 0.0
      %454 = vadd.xlane.f32.xlu0 %v453
      %v455 = vpop.xlane.xlu0 %454
      %v456 = vrcp.pop %v455
      %v457 = vmul.f32 %v452, %v456
      %vm458 = vcmp.lt.s32.totalorder %v270, 2
      %v459 = vsel %vm458, 1, 0
      %v460 = vcvt.s32.f32 %v459
      %v461 = vmul.f32 %v457, %v460
      %v462 = vsel %vm446, %v461, 0.0
      %v463 = vrot.slane %v462, 4
      %v464 = vadd.f32 %v462, %v463
      %v465 = vrot.slane %v464, 2
      %v466 = vadd.f32 %v464, %v465
      %v467 = vrot.slane %v466, 1
      %v468 = vadd.f32 %v466, %v467
      %v469 = vmul.f32 %v468, %v468
      %v470 = vsel %vm446, %v469, 0.0
      %471 = vadd.xlane.f32.xlu0 %v470
      %v472 = vpop.xlane.xlu0 %471
      %v473 = vmul.f32 %v461, %v461
      %v474 = vsel %vm446, %v473, 0.0
      %475 = vadd.xlane.f32.xlu0 %v474
      %v476 = vpop.xlane.xlu0 %475
      %v477 = vrot.slane %v476, 4
      %v478 = vadd.f32 %v476, %v477
      %v479 = vrot.slane %v478, 2
      %v480 = vadd.f32 %v478, %v479
      %v481 = vrot.slane %v480, 1
      %v482 = vadd.f32 %v480, %v481
      %v483 = vmul.f32 %v482, 2.0
      %v484 = vsub.f32 %v472, %v483
      %v485 = vmul.f32 %v484, 0.25
      %v486 = vld [vmem:[#allocation4] sm:$0x1]
      %v487 = vstv %s76
      %v488 = vmul.f32 %v485, %v487
      %v489 = vadd.f32 %v486, %v488
      %vm490 = vcmask 0
      %491 = vst.msk [vmem:[#allocation12] sm:$0x1] %vm490, %v489
    $region57: #{tpu_custom_call.1} parent=1 // pred_fallthru
      _
    // Predicated region
    $region58: #{tpu_custom_call.1} parent=1 // pred_check
      _
    $region59: #{tpu_custom_call.1} parent=1 // pred_check_branch
      %493 = sbr.rel (0) target = $region61
    $region60: #{tpu_custom_call.1} parent=1 // pred_region
      %s495 = ssub.s32 16, 16
      %496 = vsyncadd [#allocation7], %s495
      %s498 = sshll.u32 [#allocation12], 4
      %s499 = int_to_ptr.vmem [resolvable:$true] %s498
      %501 = dma.vmem_to_hbm [thread:$0]  %s499, 16, %s9, [#allocation7]
    $region61: #{tpu_custom_call.1} parent=1 // pred_fallthru
      _
    // Predicated region
    $region62: #{tpu_custom_call.1} parent=1 // pred_check
      _
    $region63: #{tpu_custom_call.1} parent=1 // pred_check_branch
      %503 = sbr.rel (0) target = $region65
    $region64: #{tpu_custom_call.1} parent=1 // pred_region
      %504 = dma.done [#allocation7], 16
    $region65: #{tpu_custom_call.1} parent=1 // pred_fallthru
      _
    %505 = vsyncpa [#allocation6], 1
    %506 = vsyncpa [#allocation11], 1
    %507 = vsyncpa [#allocation7], 1
    %508 = vsyncpa [#allocation8], 1

</llo_original>
